<compile_context>
chip_gen: v5e
topology: v5e:2x2
jax: 0.10.0
libtpu: 0.0.40
codegen_flags: <defaults>
</compile_context>

<pallas_src>
import functools

import jax
import jax.numpy as jnp
from jax import lax
from jax.experimental import pallas as pl
from jax.experimental.pallas import tpu as pltpu


# ---------------- fused kernel: projections + linear attention + output projection ----------------
def _linattn_fused_kernel(xq_ref, xkv_ref, wqt_ref, wkt_ref, wot_ref, bo_ref, mask_ref,
                          o_ref, *, heads, dim_head, n_kv, kv_shared):
    Bt, Nq, C = xq_ref.shape
    inner = heads * dim_head

    # --- projections: head-fused + batch-fused, bf16 MXU inputs, f32 accumulation ---
    xq = xq_ref[...].reshape(Bt * Nq, C)                                      # bf16
    q = jnp.dot(xq, wqt_ref[...], preferred_element_type=jnp.float32)        # (Bt*Nq, inner) f32
    q = q.reshape(Bt, Nq, inner).astype(jnp.bfloat16)

    kv_rows = xkv_ref.shape[1]                                                # n_kv or 2*n_kv
    xkv = xkv_ref[...].reshape(Bt * kv_rows, C)                               # bf16
    kv = jnp.dot(xkv, wkt_ref[...], preferred_element_type=jnp.float32)      # one wk push for k AND v
    kv = kv.reshape(Bt, kv_rows, inner).astype(jnp.bfloat16)
    if kv_shared:
        k = kv
        v = kv                                  # values use to_k on the same tensor (source behavior)
    else:
        k = kv[:, :n_kv, :]
        v = kv[:, n_kv:, :]

    if dim_head < 128:
        # Fused-head gram over the (H*D) dim, contracting over N — no in-kernel transpose.
        dots = lax.dot_general(k, v,
                               dimension_numbers=(((1,), (1,)), ((0,), (0,))),
                               preferred_element_type=jnp.float32)            # (Bt, inner, inner)
        # Precomputed block-diagonal 0/1 mask (resident input): per-head K_h^T V_h blocks only.
        dots = dots * mask_ref[...]                                           # f32 elementwise
        # q @ block_diag(dots): out[:, :, h*D:(h+1)*D] == Q_h @ (K_h^T V_h).
        attn = lax.dot_general(q, dots.astype(jnp.bfloat16),
                               dimension_numbers=(((2,), (1,)), ((0,), (0,))),
                               preferred_element_type=jnp.float32)            # (Bt, Nq, inner)
    else:
        # D already lane-dense: per-head batched matmuls avoid the Hx FLOP waste of the gram trick.
        q4 = q.reshape(Bt, Nq, heads, dim_head)
        k4 = k.reshape(Bt, n_kv, heads, dim_head)
        v4 = v.reshape(Bt, n_kv, heads, dim_head)
        dots_h = jnp.einsum('bnhd,bnhe->bhde', k4, v4,
                            preferred_element_type=jnp.float32)               # (Bt, H, D, D)
        attn = jnp.einsum('bnhd,bhde->bnhe', q4, dots_h.astype(jnp.bfloat16),
                          preferred_element_type=jnp.float32).reshape(Bt, Nq, inner)

    # Fused to_out (1/N_q already folded into wot); Dropout is identity in eval. Bias add in f32.
    attn = attn.reshape(Bt * Nq, inner).astype(jnp.bfloat16)
    y = jnp.dot(attn, wot_ref[...], preferred_element_type=jnp.float32) + bo_ref[...]   # (Bt*Nq, C)
    o_ref[...] = y.reshape(Bt, Nq, C).astype(o_ref.dtype)


# ---------------- wrapper-side sizing helpers ----------------
def _vmem_bytes_estimate(bt, nq, nkv_rows, C, inner, out_bytes):
    bf16 = 2
    # double-buffered IO blocks
    io = 2 * (bt * nq * C * bf16 + bt * nkv_rows * C * bf16 + bt * nq * C * out_bytes)
    # resident params (assume default double-buffering by the pipeliner)
    params = 2 * (2 * C * inner * bf16 + inner * C * bf16 + C * 4 + inner * inner * 4)
    # in-kernel temporaries (f32 + bf16 copies, rough upper bound)
    tmp = (6 * bt * nq * inner + 6 * bt * nkv_rows * inner
           + 6 * bt * inner * inner + 8 * bt * nq * C)
    return io + params + tmp


def _choose_batch_tile(B, nq, nkv_rows, C, inner, out_bytes, budget=24 * 1024 * 1024):
    # Keep >= 2 "parallel" grid steps when possible so v7x's 2 TensorCores are both used;
    # within that, take the largest batch tile whose footprint fits the VMEM budget
    # (amortizes per-step overhead on single-TC v5e/v6e).
    min_steps = 2 if B >= 2 else 1
    best = 1
    for bt in range(1, B + 1):
        if B % bt or (B // bt) < min_steps:
            continue
        if _vmem_bytes_estimate(bt, nq, nkv_rows, C, inner, out_bytes) <= budget:
            best = bt
    return best


def linear_attention_forward(x_q, x_k, x_v, wq, wk, wv, w_out, b_out, *, heads, dim_head,
                             batch_tile=None):
    """Returns (to_out(attention_out), to_q.weight) — mirrors the PyTorch forward."""
    B, Nq, C = x_q.shape
    _, Nkv, _ = x_k.shape
    assert x_v.shape == x_k.shape
    D, H = dim_head, heads
    inner = H * D
    assert wq.shape == (inner, C) and wk.shape == (inner, C) and w_out.shape == (C, inner)
    # wv is unused in the original forward (values are projected with to_k); kept for shape fidelity.
    del wv

    # k/v projections share the wk stationary weight: stack x_k / x_v into one operand.
    kv_shared = x_k is x_v
    xkv = x_k if kv_shared else jnp.concatenate([x_k, x_v], axis=1)        # (B, Nkv or 2*Nkv, C)
    nkv_rows = xkv.shape[1]

    # Wrapper-side layout plumbing: bf16 MXU inputs, contraction-friendly weight orientation,
    # 1/N_q folded into the output-projection weight (true sequence length; bias is NOT scaled).
    xq_b = x_q.astype(jnp.bfloat16)
    xkv_b = xkv.astype(jnp.bfloat16)
    wq_t = jnp.asarray(wq).T.astype(jnp.bfloat16)                          # (C, inner)
    wk_t = jnp.asarray(wk).T.astype(jnp.bfloat16)                          # (C, inner)
    w_out_t = (jnp.asarray(w_out) * (1.0 / Nq)).T.astype(jnp.bfloat16)     # (inner, C)
    b_out_2d = jnp.asarray(b_out).reshape(1, C).astype(jnp.float32)

    # Precomputed block-diagonal head mask (replaces in-kernel iota/div/cmp/select).
    h_idx = jnp.arange(inner, dtype=jnp.int32) // D
    head_mask = (h_idx[:, None] == h_idx[None, :]).astype(jnp.float32)     # (inner, inner)

    out_bytes = jnp.dtype(x_q.dtype).itemsize
    if batch_tile is None:
        batch_tile = _choose_batch_tile(B, Nq, nkv_rows, C, inner, out_bytes)
    assert B % batch_tile == 0
    Bt = batch_tile
    grid = (B // Bt,)

    # Explicit VMEM limit from the actual block footprint (default scoped limit is 16/32 MiB,
    # far below physical); clamped to v7x's 64 MiB physical VMEM.
    est = _vmem_bytes_estimate(Bt, Nq, nkv_rows, C, inner, out_bytes)
    vmem_limit = int(min(64 * 1024 * 1024, max(8 * 1024 * 1024, 2 * est)))

    kernel = functools.partial(_linattn_fused_kernel, heads=H, dim_head=D,
                               n_kv=Nkv, kv_shared=kv_shared)

    # TODO(synk): for very large N on v7x (64 MiB VMEM), add an "arbitrary" N-tile grid axis that
    # accumulates the (H*D,H*D) gram into a VMEM scratch (phase 1) before a second N pass for
    # q@dots + to_out (phase 2); not needed at these sizes.
    # TODO(synk): at production C/inner, mark the resident weight BlockSpecs
    # pipeline_mode=pl.Buffered(1) and pad C to a multiple of 128 for unmasked output stores;
    # both are negligible at C=32.
    out = pl.pallas_call(
        kernel,
        out_shape=jax.ShapeDtypeStruct((B, Nq, C), x_q.dtype),
        grid_spec=pltpu.PrefetchScalarGridSpec(
            num_scalar_prefetch=0,
            grid=grid,
            in_specs=[
                pl.BlockSpec((Bt, Nq, C), lambda b: (b, 0, 0)),        # x_q (bf16)
                pl.BlockSpec((Bt, nkv_rows, C), lambda b: (b, 0, 0)),  # stacked x_k|x_v (bf16)
                pl.BlockSpec((C, inner), lambda b: (0, 0)),            # wq^T   (resident)
                pl.BlockSpec((C, inner), lambda b: (0, 0)),            # wk^T   (resident)
                pl.BlockSpec((inner, C), lambda b: (0, 0)),            # w_out^T / N_q (resident)
                pl.BlockSpec((1, C), lambda b: (0, 0)),                # b_out (f32)
                pl.BlockSpec((inner, inner), lambda b: (0, 0)),        # block-diag head mask (f32)
            ],
            out_specs=pl.BlockSpec((Bt, Nq, C), lambda b: (b, 0, 0)),
        ),
        compiler_params=pltpu.CompilerParams(
            dimension_semantics=("parallel",),
            vmem_limit_bytes=vmem_limit),
    )(xq_b, xkv_b, wq_t, wk_t, w_out_t, b_out_2d, head_mask)

    return out, wq


def _reference(x_q, x_k, x_v, wq, wk, w_out, b_out, heads, dim_head):
    B, N, C = x_q.shape
    H, D = heads, dim_head
    q = (x_q @ wq.T).reshape(B, N, H, D).transpose(0, 2, 1, 3)
    k = (x_k @ wk.T).reshape(x_k.shape[0], x_k.shape[1], H, D).transpose(0, 2, 1, 3)
    v = (x_v @ wk.T).reshape(x_v.shape[0], x_v.shape[1], H, D).transpose(0, 2, 1, 3)  # values via to_k
    dots = jnp.einsum("bhnd,bhne->bhde", k, v)
    out = jnp.einsum("bhnd,bhde->bhne", q, dots) * (1.0 / N)
    out = out.transpose(0, 2, 1, 3).reshape(B, N, H * D)
    return out @ w_out.T + b_out


if __name__ == "__main__":
    B, N, C = 2, 64, 32          # batch, seq, input_dim
    H, D = 4, 32                 # heads, dim_head
    inner = H * D

    key = jax.random.PRNGKey(0)
    kq, kk, kv, kxq, kxk, kxv, kwo, kbo = jax.random.split(key, 8)

    # Deterministic synthetic parameters (the module's __init__ defines these shapes).
    wq = jax.random.normal(kq, (inner, C), jnp.float32) * 0.05
    wk = jax.random.normal(kk, (inner, C), jnp.float32) * 0.05
    wv = jax.random.normal(kv, (inner, C), jnp.float32) * 0.05  # defined but unused (source behavior)
    w_out = jax.random.normal(kwo, (C, inner), jnp.float32) * 0.05
    b_out = jax.random.normal(kbo, (C,), jnp.float32) * 0.01

    x_q = jax.random.normal(kxq, (B, N, C), jnp.float32)
    x_k = jax.random.normal(kxk, (B, N, C), jnp.float32)
    x_v = jax.random.normal(kxv, (B, N, C), jnp.float32)

    out, qw = linear_attention_forward(
        x_q, x_k, x_v, wq, wk, wv, w_out, b_out, heads=H, dim_head=D)
    out = jax.block_until_ready(out)
    qw = jax.block_until_ready(qw)

    ref = _reference(x_q, x_k, x_v, wq, wk, w_out, b_out, H, D)
    assert out.shape == (B, N, C) and qw.shape == (inner, C)
    # bf16 MXU inputs with f32 accumulation -> loosened tolerance vs the f32 reference.
    assert jnp.allclose(out, ref, atol=2e-2, rtol=2e-2), float(jnp.max(jnp.abs(out - ref)))
    assert jnp.allclose(qw, wq)

    # TODO(synk): InstanceNorm1d on k/v (galerkin) / q/k (fourier) is computed but unused in the
    # default (no padding_mask) branch of the original forward, so it is intentionally omitted.
    print("KERNEL_OK")
</pallas_src>

<mosaic_0001>
module attributes {stable_mosaic.version = 11 : i64} {
  func.func @_linattn_fused_kernel(%arg0: i32, %arg1: memref<1x64x32xbf16, #tpu.memory_space<vmem>>, %arg2: memref<1x128x32xbf16, #tpu.memory_space<vmem>>, %arg3: memref<32x128xbf16, #tpu.memory_space<vmem>>, %arg4: memref<32x128xbf16, #tpu.memory_space<vmem>>, %arg5: memref<128x32xbf16, #tpu.memory_space<vmem>>, %arg6: memref<1x32xf32, #tpu.memory_space<vmem>>, %arg7: memref<128x128xf32, #tpu.memory_space<vmem>>, %arg8: memref<1x64x32xf32, #tpu.memory_space<vmem>>) attributes {dimension_semantics = [#tpu.dimension_semantics<parallel>], iteration_bounds = array<i64: 2>, scalar_prefetch = 0 : i64, scratch_operands = 0 : i64, tpu.core_type = #tpu.core_type<tc>, window_params = [{transform_indices = @transform_0, window_bounds = array<i64: 1, 64, 32>}, {transform_indices = @transform_1, window_bounds = array<i64: 1, 128, 32>}, {pipeline_mode = #tpu.pipeline_mode<synchronous>, transform_indices = @transform_2, window_bounds = array<i64: 32, 128>}, {pipeline_mode = #tpu.pipeline_mode<synchronous>, transform_indices = @transform_3, window_bounds = array<i64: 32, 128>}, {pipeline_mode = #tpu.pipeline_mode<synchronous>, transform_indices = @transform_4, window_bounds = array<i64: 128, 32>}, {pipeline_mode = #tpu.pipeline_mode<synchronous>, transform_indices = @transform_5, window_bounds = array<i64: 1, 32>}, {pipeline_mode = #tpu.pipeline_mode<synchronous>, transform_indices = @transform_6, window_bounds = array<i64: 128, 128>}, {transform_indices = @transform_7, window_bounds = array<i64: 1, 64, 32>}]} {
    %c0 = arith.constant 0 : index
    %c0_0 = arith.constant 0 : index
    %c0_1 = arith.constant 0 : index
    %0 = vector.load %arg1[%c0, %c0_0, %c0_1] : memref<1x64x32xbf16, #tpu.memory_space<vmem>>, vector<1x64x32xbf16>
    %1 = vector.shape_cast %0 : vector<1x64x32xbf16> to vector<64x32xbf16>
    %c0_2 = arith.constant 0 : index
    %c0_3 = arith.constant 0 : index
    %2 = vector.load %arg3[%c0_2, %c0_3] : memref<32x128xbf16, #tpu.memory_space<vmem>>, vector<32x128xbf16>
    %cst = arith.constant dense<0.000000e+00> : vector<64x128xf32>
    %3 = tpu.matmul %1, %2, %cst {dimension_numbers = #tpu.dot_dimension_numbers<[1], [0], [0], [1], [0, 0, 1, 1], [], []>} : vector<64x32xbf16>, vector<32x128xbf16>, vector<64x128xf32> -> vector<64x128xf32>
    %4 = vector.shape_cast %3 : vector<64x128xf32> to vector<1x64x128xf32>
    %5 = arith.truncf %4 : vector<1x64x128xf32> to vector<1x64x128xbf16>
    %c0_4 = arith.constant 0 : index
    %c0_5 = arith.constant 0 : index
    %c0_6 = arith.constant 0 : index
    %6 = vector.load %arg2[%c0_4, %c0_5, %c0_6] : memref<1x128x32xbf16, #tpu.memory_space<vmem>>, vector<1x128x32xbf16>
    %7 = vector.shape_cast %6 : vector<1x128x32xbf16> to vector<128x32xbf16>
    %c0_7 = arith.constant 0 : index
    %c0_8 = arith.constant 0 : index
    %8 = vector.load %arg4[%c0_7, %c0_8] : memref<32x128xbf16, #tpu.memory_space<vmem>>, vector<32x128xbf16>
    %cst_9 = arith.constant dense<0.000000e+00> : vector<128x128xf32>
    %9 = tpu.matmul %7, %8, %cst_9 {dimension_numbers = #tpu.dot_dimension_numbers<[1], [0], [0], [1], [0, 0, 1, 1], [], []>} : vector<128x32xbf16>, vector<32x128xbf16>, vector<128x128xf32> -> vector<128x128xf32>
    %10 = vector.shape_cast %9 : vector<128x128xf32> to vector<1x128x128xf32>
    %11 = arith.truncf %10 : vector<1x128x128xf32> to vector<1x128x128xbf16>
    %12 = vector.extract_strided_slice %11 {offsets = [0, 0, 0], sizes = [1, 64, 128], strides = [1, 1, 1]} : vector<1x128x128xbf16> to vector<1x64x128xbf16>
    %13 = vector.extract_strided_slice %11 {offsets = [0, 64, 0], sizes = [1, 64, 128], strides = [1, 1, 1]} : vector<1x128x128xbf16> to vector<1x64x128xbf16>
    %cst_10 = arith.constant dense<0.000000e+00> : vector<1x128x128xf32>
    %14 = tpu.matmul %12, %13, %cst_10 {dimension_numbers = #tpu.dot_dimension_numbers<[1], [1], [2], [2], [0, 0, 0, 2, 1, 2], [0], [0]>} : vector<1x64x128xbf16>, vector<1x64x128xbf16>, vector<1x128x128xf32> -> vector<1x128x128xf32>
    %c0_11 = arith.constant 0 : index
    %c0_12 = arith.constant 0 : index
    %15 = vector.load %arg7[%c0_11, %c0_12] : memref<128x128xf32, #tpu.memory_space<vmem>>, vector<128x128xf32>
    %16 = vector.shape_cast %15 : vector<128x128xf32> to vector<1x128x128xf32>
    %17 = arith.mulf %14, %16 : vector<1x128x128xf32>
    %18 = arith.truncf %17 : vector<1x128x128xf32> to vector<1x128x128xbf16>
    %cst_13 = arith.constant dense<0.000000e+00> : vector<1x64x128xf32>
    %19 = tpu.matmul %5, %18, %cst_13 {dimension_numbers = #tpu.dot_dimension_numbers<[2], [1], [1], [2], [0, 0, 0, 1, 1, 2], [0], [0]>} : vector<1x64x128xbf16>, vector<1x128x128xbf16>, vector<1x64x128xf32> -> vector<1x64x128xf32>
    %20 = vector.shape_cast %19 : vector<1x64x128xf32> to vector<64x128xf32>
    %21 = arith.truncf %20 : vector<64x128xf32> to vector<64x128xbf16>
    %c0_14 = arith.constant 0 : index
    %c0_15 = arith.constant 0 : index
    %22 = vector.load %arg5[%c0_14, %c0_15] : memref<128x32xbf16, #tpu.memory_space<vmem>>, vector<128x32xbf16>
    %cst_16 = arith.constant dense<0.000000e+00> : vector<64x32xf32>
    %23 = tpu.matmul %21, %22, %cst_16 {dimension_numbers = #tpu.dot_dimension_numbers<[1], [0], [0], [1], [0, 0, 1, 1], [], []>} : vector<64x128xbf16>, vector<128x32xbf16>, vector<64x32xf32> -> vector<64x32xf32>
    %c0_17 = arith.constant 0 : index
    %c0_18 = arith.constant 0 : index
    %24 = vector.load %arg6[%c0_17, %c0_18] : memref<1x32xf32, #tpu.memory_space<vmem>>, vector<1x32xf32>
    %25 = vector.broadcast %24 : vector<1x32xf32> to vector<64x32xf32>
    %26 = arith.addf %23, %25 : vector<64x32xf32>
    %27 = vector.shape_cast %26 : vector<64x32xf32> to vector<1x64x32xf32>
    %c0_19 = arith.constant 0 : index
    %c0_20 = arith.constant 0 : index
    %c0_21 = arith.constant 0 : index
    %28 = vector.load %arg8[%c0_19, %c0_20, %c0_21] : memref<1x64x32xf32, #tpu.memory_space<vmem>>, vector<1x64x32xf32>
    tpu.vector_store %arg8[%c0_19, %c0_20, %c0_21], %27 {strides = array<i32>} : memref<1x64x32xf32, #tpu.memory_space<vmem>>, vector<1x64x32xf32>,
    return
  }
  func.func @transform_0(%arg0: i32) -> (i32, i32, i32) {
    %c0_i32 = arith.constant 0 : i32
    %c0_i32_0 = arith.constant 0 : i32
    %c0_i32_1 = arith.constant 0 : i32
    return %arg0, %c0_i32, %c0_i32_0 : i32, i32, i32
  }
  func.func @transform_1(%arg0: i32) -> (i32, i32, i32) {
    %c0_i32 = arith.constant 0 : i32
    %c0_i32_0 = arith.constant 0 : i32
    %c0_i32_1 = arith.constant 0 : i32
    return %arg0, %c0_i32, %c0_i32_0 : i32, i32, i32
  }
  func.func @transform_2(%arg0: i32) -> (i32, i32) {
    %c0_i32 = arith.constant 0 : i32
    %c0_i32_0 = arith.constant 0 : i32
    %c0_i32_1 = arith.constant 0 : i32
    return %c0_i32, %c0_i32_0 : i32, i32
  }
  func.func @transform_3(%arg0: i32) -> (i32, i32) {
    %c0_i32 = arith.constant 0 : i32
    %c0_i32_0 = arith.constant 0 : i32
    %c0_i32_1 = arith.constant 0 : i32
    return %c0_i32, %c0_i32_0 : i32, i32
  }
  func.func @transform_4(%arg0: i32) -> (i32, i32) {
    %c0_i32 = arith.constant 0 : i32
    %c0_i32_0 = arith.constant 0 : i32
    %c0_i32_1 = arith.constant 0 : i32
    return %c0_i32, %c0_i32_0 : i32, i32
  }
  func.func @transform_5(%arg0: i32) -> (i32, i32) {
    %c0_i32 = arith.constant 0 : i32
    %c0_i32_0 = arith.constant 0 : i32
    %c0_i32_1 = arith.constant 0 : i32
    return %c0_i32, %c0_i32_0 : i32, i32
  }
  func.func @transform_6(%arg0: i32) -> (i32, i32) {
    %c0_i32 = arith.constant 0 : i32
    %c0_i32_0 = arith.constant 0 : i32
    %c0_i32_1 = arith.constant 0 : i32
    return %c0_i32, %c0_i32_0 : i32, i32
  }
  func.func @transform_7(%arg0: i32) -> (i32, i32, i32) {
    %c0_i32 = arith.constant 0 : i32
    %c0_i32_0 = arith.constant 0 : i32
    %c0_i32_1 = arith.constant 0 : i32
    return %arg0, %c0_i32, %c0_i32_0 : i32, i32, i32
  }
}

</mosaic_0001>

<llo_original>
// kernel: tpu_custom_call.1
$region0: #{tpu_custom_call.1}
  #allocation0 [shape = 'u32[]', space=smem, size = 0x4, offset = 0x4, fixed_abs, tag = 'smem constant byte address 0x4 - core index']
  #allocation1 [shape = 'u32[72,128]{1,0:T(1,128)}', space=vmem, size = 0x9000, scoped, tag = 'internal scratch']
  %s0 = inlined_call_operand.vmem [shape: bf16[2,64,32], index: 0, kind: input, shape index: {}]
  %s1 = inlined_call_operand.vmem [shape: bf16[2,128,32], index: 1, kind: input, shape index: {}]
  %s2 = inlined_call_operand.vmem [shape: bf16[32,128], index: 2, kind: input, shape index: {}]
  %s3 = inlined_call_operand.vmem [shape: bf16[32,128], index: 3, kind: input, shape index: {}]
  %s4 = inlined_call_operand.vmem [shape: bf16[128,32], index: 4, kind: input, shape index: {}]
  %s5 = inlined_call_operand.vmem [shape: f32[1,32], index: 5, kind: input, shape index: {}]
  %s6 = inlined_call_operand.vmem [shape: f32[128,128], index: 6, kind: input, shape index: {}]
  %s7 = inlined_call_operand.vmem [shape: f32[2,64,32], index: 7, kind: output, shape index: {}]
  %s8 = sld [smem:[#allocation0]]
  $region61: #{tpu_custom_call.1} parent=0
    _
  %s10 = ssub.s32 1, %s8
  %s11 = scalar_select 0, %s10, %s8
  loop: start=0, step=1, limit=4
  $region2: #{tpu_custom_call.1} parent=0 // loop_pre_header
    _
  $region3: #{tpu_custom_call.1} parent=0 // loop_header
    %s13 = sphi 0, %s17
    %p14 = scmp.ge.s32.totalorder %s13, 4
    %s23 = sphi 0, %s25
    %s26 = sphi 0, %s23
    %s27 = sphi 0, %s26
    %s43 = sphi 0, %s27
    %s49 = sphi 0, %s51
    %s52 = sphi 0, %s49
    %s53 = sphi 0, %s52
    %s69 = sphi 0, %s53
    %s73 = sphi 0, %s73
    %s75 = sphi 0, %s73
    %s76 = sphi 0, %s75
    %s90 = sphi 0, %s76
    %s94 = sphi 0, %s94
    %s96 = sphi 0, %s94
    %s97 = sphi 0, %s96
    %s111 = sphi 0, %s97
    %s115 = sphi 0, %s115
    %s117 = sphi 0, %s115
    %s118 = sphi 0, %s117
    %s132 = sphi 0, %s118
    %s136 = sphi 0, %s136
    %s138 = sphi 0, %s136
    %s139 = sphi 0, %s138
    %s153 = sphi 0, %s139
    %s157 = sphi 0, %s157
    %s159 = sphi 0, %s157
    %s160 = sphi 0, %s159
    %s174 = sphi 0, %s160
    %s180 = sphi 0, %s182
    %s183 = sphi 0, %s180
    %s184 = sphi 0, %s183
    %s200 = sphi 0, %s184
  $region4: #{tpu_custom_call.1} parent=0 // loop_header_branch
    %16 = sbr.rel (%p14) target = $region8
  $region5: #{tpu_custom_call.1} parent=0 // loop_body
    %s18 = ssub.s32 %s13, 1
    %s19 = ssub.s32 %s13, 2
    %s20 = sadd.s32 %s13, 1
    %s21 = ssub.s32 %s13, %s20
    %p22 = scmp.eq.s32.totalorder %s21, 0
    %s24 = sadd.s32 %s23, 1
    %s25 = scalar_select %p22, %s23, %s24
    %p28 = pneg %p22
    %p29 = scmp.eq.s32.totalorder %s13, 1
    %p30 = por %p28, %p29
    %p31 = scmp.ne.s32.totalorder %s23, %s26
    %p32 = scmp.eq.s32.totalorder %s13, 0
    %p33 = por %p31, %p32
    %p34 = scmp.ne.s32.totalorder %s23, %s26
    %p35 = scmp.eq.s32.totalorder %s18, 1
    %p36 = por %p34, %p35
    %p37 = scmp.ne.s32.totalorder %s26, %s27
    %p38 = scmp.eq.s32.totalorder %s18, 0
    %p39 = por %p37, %p38
    %p40 = scmp.ne.s32.totalorder %s26, %s27
    %p41 = scmp.eq.s32.totalorder %s19, 1
    %p42 = por %p40, %p41
    %p44 = scmp.ne.s32.totalorder %s27, %s43
    %p45 = scmp.eq.s32.totalorder %s19, 0
    %p46 = por %p44, %p45
    %s47 = ssub.s32 %s13, %s20
    %p48 = scmp.eq.s32.totalorder %s47, 0
    %s50 = sadd.s32 %s49, 1
    %s51 = scalar_select %p48, %s49, %s50
    %p54 = pneg %p48
    %p55 = scmp.eq.s32.totalorder %s13, 1
    %p56 = por %p54, %p55
    %p57 = scmp.ne.s32.totalorder %s49, %s52
    %p58 = scmp.eq.s32.totalorder %s13, 0
    %p59 = por %p57, %p58
    %p60 = scmp.ne.s32.totalorder %s49, %s52
    %p61 = scmp.eq.s32.totalorder %s18, 1
    %p62 = por %p60, %p61
    %p63 = scmp.ne.s32.totalorder %s52, %s53
    %p64 = scmp.eq.s32.totalorder %s18, 0
    %p65 = por %p63, %p64
    %p66 = scmp.ne.s32.totalorder %s52, %s53
    %p67 = scmp.eq.s32.totalorder %s19, 1
    %p68 = por %p66, %p67
    %p70 = scmp.ne.s32.totalorder %s53, %s69
    %p71 = scmp.eq.s32.totalorder %s19, 0
    %p72 = por %p70, %p71
    %s74 = sadd.s32 %s73, 1
    %p77 = scmp.eq.s32.totalorder %s13, 1
    %p78 = scmp.ne.s32.totalorder %s73, %s75
    %p79 = scmp.eq.s32.totalorder %s13, 0
    %p80 = por %p78, %p79
    %p81 = scmp.ne.s32.totalorder %s73, %s75
    %p82 = scmp.eq.s32.totalorder %s18, 1
    %p83 = por %p81, %p82
    %p84 = scmp.ne.s32.totalorder %s75, %s76
    %p85 = scmp.eq.s32.totalorder %s18, 0
    %p86 = por %p84, %p85
    %p87 = scmp.ne.s32.totalorder %s75, %s76
    %p88 = scmp.eq.s32.totalorder %s19, 1
    %p89 = por %p87, %p88
    %p91 = scmp.ne.s32.totalorder %s76, %s90
    %p92 = scmp.eq.s32.totalorder %s19, 0
    %p93 = por %p91, %p92
    %s95 = sadd.s32 %s94, 1
    %p98 = scmp.eq.s32.totalorder %s13, 1
    %p99 = scmp.ne.s32.totalorder %s94, %s96
    %p100 = scmp.eq.s32.totalorder %s13, 0
    %p101 = por %p99, %p100
    %p102 = scmp.ne.s32.totalorder %s94, %s96
    %p103 = scmp.eq.s32.totalorder %s18, 1
    %p104 = por %p102, %p103
    %p105 = scmp.ne.s32.totalorder %s96, %s97
    %p106 = scmp.eq.s32.totalorder %s18, 0
    %p107 = por %p105, %p106
    %p108 = scmp.ne.s32.totalorder %s96, %s97
    %p109 = scmp.eq.s32.totalorder %s19, 1
    %p110 = por %p108, %p109
    %p112 = scmp.ne.s32.totalorder %s97, %s111
    %p113 = scmp.eq.s32.totalorder %s19, 0
    %p114 = por %p112, %p113
    %s116 = sadd.s32 %s115, 1
    %p119 = scmp.eq.s32.totalorder %s13, 1
    %p120 = scmp.ne.s32.totalorder %s115, %s117
    %p121 = scmp.eq.s32.totalorder %s13, 0
    %p122 = por %p120, %p121
    %p123 = scmp.ne.s32.totalorder %s115, %s117
    %p124 = scmp.eq.s32.totalorder %s18, 1
    %p125 = por %p123, %p124
    %p126 = scmp.ne.s32.totalorder %s117, %s118
    %p127 = scmp.eq.s32.totalorder %s18, 0
    %p128 = por %p126, %p127
    %p129 = scmp.ne.s32.totalorder %s117, %s118
    %p130 = scmp.eq.s32.totalorder %s19, 1
    %p131 = por %p129, %p130
    %p133 = scmp.ne.s32.totalorder %s118, %s132
    %p134 = scmp.eq.s32.totalorder %s19, 0
    %p135 = por %p133, %p134
    %s137 = sadd.s32 %s136, 1
    %p140 = scmp.eq.s32.totalorder %s13, 1
    %p141 = scmp.ne.s32.totalorder %s136, %s138
    %p142 = scmp.eq.s32.totalorder %s13, 0
    %p143 = por %p141, %p142
    %p144 = scmp.ne.s32.totalorder %s136, %s138
    %p145 = scmp.eq.s32.totalorder %s18, 1
    %p146 = por %p144, %p145
    %p147 = scmp.ne.s32.totalorder %s138, %s139
    %p148 = scmp.eq.s32.totalorder %s18, 0
    %p149 = por %p147, %p148
    %p150 = scmp.ne.s32.totalorder %s138, %s139
    %p151 = scmp.eq.s32.totalorder %s19, 1
    %p152 = por %p150, %p151
    %p154 = scmp.ne.s32.totalorder %s139, %s153
    %p155 = scmp.eq.s32.totalorder %s19, 0
    %p156 = por %p154, %p155
    %s158 = sadd.s32 %s157, 1
    %p161 = scmp.eq.s32.totalorder %s13, 1
    %p162 = scmp.ne.s32.totalorder %s157, %s159
    %p163 = scmp.eq.s32.totalorder %s13, 0
    %p164 = por %p162, %p163
    %p165 = scmp.ne.s32.totalorder %s157, %s159
    %p166 = scmp.eq.s32.totalorder %s18, 1
    %p167 = por %p165, %p166
    %p168 = scmp.ne.s32.totalorder %s159, %s160
    %p169 = scmp.eq.s32.totalorder %s18, 0
    %p170 = por %p168, %p169
    %p171 = scmp.ne.s32.totalorder %s159, %s160
    %p172 = scmp.eq.s32.totalorder %s19, 1
    %p173 = por %p171, %p172
    %p175 = scmp.ne.s32.totalorder %s160, %s174
    %p176 = scmp.eq.s32.totalorder %s19, 0
    %p177 = por %p175, %p176
    %s178 = ssub.s32 %s13, %s20
    %p179 = scmp.eq.s32.totalorder %s178, 0
    %s181 = sadd.s32 %s180, 1
    %s182 = scalar_select %p179, %s180, %s181
    %p185 = pneg %p179
    %p186 = scmp.eq.s32.totalorder %s13, 1
    %p187 = por %p185, %p186
    %p188 = scmp.ne.s32.totalorder %s180, %s183
    %p189 = scmp.eq.s32.totalorder %s13, 0
    %p190 = por %p188, %p189
    %p191 = scmp.ne.s32.totalorder %s180, %s183
    %p192 = scmp.eq.s32.totalorder %s18, 1
    %p193 = por %p191, %p192
    %p194 = scmp.ne.s32.totalorder %s183, %s184
    %p195 = scmp.eq.s32.totalorder %s18, 0
    %p196 = por %p194, %p195
    %p197 = scmp.ne.s32.totalorder %s183, %s184
    %p198 = scmp.eq.s32.totalorder %s19, 1
    %p199 = por %p197, %p198
    %p201 = scmp.ne.s32.totalorder %s184, %s200
    %p202 = scmp.eq.s32.totalorder %s19, 0
    %p203 = por %p201, %p202
    %p204 = scmp.le.s32.totalorder 1, %s13
    %p205 = scmp.lt.s32.totalorder %s13, 3
    %p206 = pnand %p204, %p205
    %p207 = pneg %p206
    // Predicated region
    $region9: #{tpu_custom_call.1} parent=5 // pred_check
      _
    $region10: #{tpu_custom_call.1} parent=5 // pred_check_branch
      %209 = sbr.rel (%p206) target = $region12
    $region11: #{tpu_custom_call.1} parent=5 // pred_region
      %s210 = ssub.s32 %s13, 1
      // Predicated region
      $region13: #{tpu_custom_call.1} parent=11 // pred_check
        %p211 = pneg %p86
      $region14: #{tpu_custom_call.1} parent=11 // pred_check_branch
        %213 = sbr.rel (%p211) target = $region16
      $region15: #{tpu_custom_call.1} parent=11 // pred_region
        _
      $region16: #{tpu_custom_call.1} parent=11 // pred_fallthru
        _
      // Predicated region
      $region17: #{tpu_custom_call.1} parent=11 // pred_check
        %p214 = pneg %p107
      $region18: #{tpu_custom_call.1} parent=11 // pred_check_branch
        %216 = sbr.rel (%p214) target = $region20
      $region19: #{tpu_custom_call.1} parent=11 // pred_region
        _
      $region20: #{tpu_custom_call.1} parent=11 // pred_fallthru
        _
      // Predicated region
      $region21: #{tpu_custom_call.1} parent=11 // pred_check
        %p217 = pneg %p128
      $region22: #{tpu_custom_call.1} parent=11 // pred_check_branch
        %219 = sbr.rel (%p217) target = $region24
      $region23: #{tpu_custom_call.1} parent=11 // pred_region
        _
      $region24: #{tpu_custom_call.1} parent=11 // pred_fallthru
        _
      // Predicated region
      $region25: #{tpu_custom_call.1} parent=11 // pred_check
        %p220 = pneg %p149
      $region26: #{tpu_custom_call.1} parent=11 // pred_check_branch
        %222 = sbr.rel (%p220) target = $region28
      $region27: #{tpu_custom_call.1} parent=11 // pred_region
        _
      $region28: #{tpu_custom_call.1} parent=11 // pred_fallthru
        _
      // Predicated region
      $region29: #{tpu_custom_call.1} parent=11 // pred_check
        %p223 = pneg %p170
      $region30: #{tpu_custom_call.1} parent=11 // pred_check_branch
        %225 = sbr.rel (%p223) target = $region32
      $region31: #{tpu_custom_call.1} parent=11 // pred_region
        _
      $region32: #{tpu_custom_call.1} parent=11 // pred_fallthru
        _
    $region12: #{tpu_custom_call.1} parent=5 // pred_fallthru
      _
    %p226 = scmp.lt.s32.totalorder %s13, 2
    // Predicated region
    $region33: #{tpu_custom_call.1} parent=5 // pred_check
      %p227 = pneg %p226
    $region34: #{tpu_custom_call.1} parent=5 // pred_check_branch
      %229 = sbr.rel (%p227) target = $region36
    $region35: #{tpu_custom_call.1} parent=5 // pred_region
      // Predicated region
      $region37: #{tpu_custom_call.1} parent=35 // pred_check
        %p230 = pneg %p33
      $region38: #{tpu_custom_call.1} parent=35 // pred_check_branch
        %232 = sbr.rel (%p230) target = $region40
      $region39: #{tpu_custom_call.1} parent=35 // pred_region
        %p233 = scmp.lt.s32.totalorder %s13, 1
        %s234 = scalar_select %p233, %s13, 1
        %s235 = smul.addr %s234, 8
        %s236 = smul.addr %s235, 4
        %s237 = scalar_lea.vmem %s0, %s236
      $region40: #{tpu_custom_call.1} parent=35 // pred_fallthru
        _
      // Predicated region
      $region41: #{tpu_custom_call.1} parent=35 // pred_check
        %p238 = pneg %p59
      $region42: #{tpu_custom_call.1} parent=35 // pred_check_branch
        %240 = sbr.rel (%p238) target = $region44
      $region43: #{tpu_custom_call.1} parent=35 // pred_region
        %p241 = scmp.lt.s32.totalorder %s13, 1
        %s242 = scalar_select %p241, %s13, 1
        %s243 = smul.addr %s242, 16
        %s244 = smul.addr %s243, 4
        %s245 = scalar_lea.vmem %s1, %s244
      $region44: #{tpu_custom_call.1} parent=35 // pred_fallthru
        _
    $region36: #{tpu_custom_call.1} parent=5 // pred_fallthru
      _
    %p246 = scmp.le.s32.totalorder 1, %s13
    %p247 = scmp.lt.s32.totalorder %s13, 3
    %p248 = pnand %p246, %p247
    %p249 = pneg %p248
    // Predicated region
    $region45: #{tpu_custom_call.1} parent=5 // pred_check
      _
    $region46: #{tpu_custom_call.1} parent=5 // pred_check_branch
      %251 = sbr.rel (%p248) target = $region48
    $region47: #{tpu_custom_call.1} parent=5 // pred_region
      %s252 = ssub.s32 %s13, 1
      %p253 = scmp.lt.s32.totalorder %s18, 1
      %s254 = scalar_select %p253, %s18, 1
      %s255 = smul.addr %s254, 8
      %s256 = smul.addr %s255, 4
      %s257 = scalar_lea.vmem %s0, %s256
      %p258 = pneg %p39
      %p259 = pneg %p36
      %p260 = scmp.lt.s32.totalorder %s18, 1
      %s261 = scalar_select %p260, %s18, 1
      %s262 = smul.addr %s261, 16
      %s263 = smul.addr %s262, 4
      %s264 = scalar_lea.vmem %s1, %s263
      %p265 = pneg %p65
      %p266 = pneg %p62
      %p267 = pneg %p86
      %p268 = pneg %p83
      %p269 = pneg %p107
      %p270 = pneg %p104
      %p271 = pneg %p128
      %p272 = pneg %p125
      %p273 = pneg %p149
      %p274 = pneg %p146
      %p275 = pneg %p170
      %p276 = pneg %p167
      %p277 = pneg %p196
      %p278 = pneg %p193
      %p279 = scmp.lt.s32.totalorder %s18, 1
      %s280 = scalar_select %p279, %s18, 1
      %s281 = smul.addr %s280, 8
      %s282 = smul.addr %s281, 8
      %s283 = scalar_lea.vmem %s7, %s282
      %p284 = scmp.lt.s32.totalorder %s18, 1
      %s285 = scalar_select %p284, %s18, 1
      %s286 = smul.addr %s285, 8
      %s287 = smul.addr %s286, 4
      %s288 = scalar_lea.vmem %s0, %s287
      %p289 = scmp.lt.s32.totalorder %s18, 1
      %s290 = scalar_select %p289, %s18, 1
      %s291 = smul.addr %s290, 16
      %s292 = smul.addr %s291, 4
      %s293 = scalar_lea.vmem %s1, %s292
      %p294 = scmp.lt.s32.totalorder %s18, 1
      %s295 = scalar_select %p294, %s18, 1
      %s296 = smul.addr %s295, 8
      %s297 = smul.addr %s296, 8
      %s298 = scalar_lea.vmem %s7, %s297
      %v300 = vld [vmem:[%s288] sm:$0xf]
      %v301 = vld [vmem:[%s288 + $0x4] sm:$0xf]
      %v302 = vld [vmem:[%s288 + $0x8] sm:$0xf]
      %v303 = vld [vmem:[%s288 + $0xc] sm:$0xf]
      %v304 = vld [vmem:[%s288 + $0x10] sm:$0xf]
      %v305 = vld [vmem:[%s288 + $0x14] sm:$0xf]
      %v306 = vld [vmem:[%s288 + $0x18] sm:$0xf]
      %v307 = vld [vmem:[%s288 + $0x1c] sm:$0xf]
      %v308 = vld [vmem:[%s2] sm:$0xf]
      %v309 = vld [vmem:[%s2 + $0x4] sm:$0xf]
      %v310 = vld [vmem:[%s2 + $0x8] sm:$0xf]
      %v311 = vld [vmem:[%s2 + $0xc] sm:$0xf]
      %v320 = vunpack.c.l.b16 %v300
      %v321 = vunpack.c.l.b16 %v301
      %v322 = vunpack.c.l.b16 %v302
      %v323 = vunpack.c.l.b16 %v303
      %v324 = vunpack.c.l.b16 %v304
      %v325 = vunpack.c.l.b16 %v305
      %v326 = vunpack.c.l.b16 %v306
      %v327 = vunpack.c.l.b16 %v307
      %v328 = vpack.c.b16 %v321, %v320
      %v329 = vpack.c.b16 %v323, %v322
      %v330 = vpack.c.b16 %v325, %v324
      %v331 = vpack.c.b16 %v327, %v326
      %v336 = vunpack.c.l.b16 %v308
      %v337 = vunpack.c.l.b16 %v309
      %v338 = vunpack.c.l.b16 %v310
      %v339 = vunpack.c.l.b16 %v311
      %v340 = vpack.c.b16 %v337, %v336
      %v341 = vpack.c.b16 %v339, %v338
      %vm344 = vcmask 261120
      %v346 = vsel %vm344, %v328, 0
      %v349 = vsel %vm344, %v329, 0
      %v352 = vsel %vm344, %v330, 0
      %v355 = vsel %vm344, %v331, 0
      %357 = vmatpush.bf16.msra.mxu0 0
      %358 = vmatpush.bf16.msra.mxu0 0
      %359 = vmatpush.bf16.msra.mxu0 0
      %360 = vmatpush.bf16.msra.mxu0 0
      %361 = vmatpush.bf16.msra.mxu0 0
      %362 = vmatpush.bf16.msra.mxu0 0
      %363 = vmatpush.bf16.msra.mxu0 %v341
      %364 = vmatpush.bf16.msra.mxu0 %v340
      %365 = vmatmul.bf16.gmra.mxu0 %v346
      %v366 = vpop.f32.mrf.mxu0
      %v367 = vadd.f32 0.0, %v366
      %v368 = vpop.f32.mrf.mxu0
      %v369 = vadd.f32 0.0, %v368
      %370 = vmatmul.bf16.gmra.mxu0 %v349
      %v371 = vpop.f32.mrf.mxu0
      %v372 = vadd.f32 0.0, %v371
      %v373 = vpop.f32.mrf.mxu0
      %v374 = vadd.f32 0.0, %v373
      %375 = vmatmul.bf16.gmra.mxu0 %v352
      %v376 = vpop.f32.mrf.mxu0
      %v377 = vadd.f32 0.0, %v376
      %v378 = vpop.f32.mrf.mxu0
      %v379 = vadd.f32 0.0, %v378
      %380 = vmatmul.bf16.gmra.mxu0 %v355
      %v381 = vpop.f32.mrf.mxu0
      %v382 = vadd.f32 0.0, %v381
      %v383 = vpop.f32.mrf.mxu0
      %v384 = vadd.f32 0.0, %v383
      %385 = vdwg.mxu0
      %v386 = vpack.c.bf16 %v367, %v367
      %v387 = vpack.c.bf16 %v369, %v369
      %v388 = vpack.c.bf16 %v372, %v372
      %v389 = vpack.c.bf16 %v374, %v374
      %v390 = vpack.c.bf16 %v377, %v377
      %v391 = vpack.c.bf16 %v379, %v379
      %v392 = vpack.c.bf16 %v382, %v382
      %v393 = vpack.c.bf16 %v384, %v384
      %v394 = vld [vmem:[%s293] sm:$0xf]
      %v395 = vld [vmem:[%s293 + $0x4] sm:$0xf]
      %v396 = vld [vmem:[%s293 + $0x8] sm:$0xf]
      %v397 = vld [vmem:[%s293 + $0xc] sm:$0xf]
      %v398 = vld [vmem:[%s293 + $0x10] sm:$0xf]
      %v399 = vld [vmem:[%s293 + $0x14] sm:$0xf]
      %v400 = vld [vmem:[%s293 + $0x18] sm:$0xf]
      %v401 = vld [vmem:[%s293 + $0x1c] sm:$0xf]
      %v402 = vld [vmem:[%s293 + $0x20] sm:$0xf]
      %v403 = vld [vmem:[%s293 + $0x24] sm:$0xf]
      %v404 = vld [vmem:[%s293 + $0x28] sm:$0xf]
      %v405 = vld [vmem:[%s293 + $0x2c] sm:$0xf]
      %v406 = vld [vmem:[%s293 + $0x30] sm:$0xf]
      %v407 = vld [vmem:[%s293 + $0x34] sm:$0xf]
      %v408 = vld [vmem:[%s293 + $0x38] sm:$0xf]
      %v409 = vld [vmem:[%s293 + $0x3c] sm:$0xf]
      %v410 = vld [vmem:[%s3] sm:$0xf]
      %v411 = vld [vmem:[%s3 + $0x4] sm:$0xf]
      %v412 = vld [vmem:[%s3 + $0x8] sm:$0xf]
      %v413 = vld [vmem:[%s3 + $0xc] sm:$0xf]
      %v430 = vunpack.c.l.b16 %v394
      %v431 = vunpack.c.l.b16 %v395
      %v432 = vunpack.c.l.b16 %v396
      %v433 = vunpack.c.l.b16 %v397
      %v434 = vunpack.c.l.b16 %v398
      %v435 = vunpack.c.l.b16 %v399
      %v436 = vunpack.c.l.b16 %v400
      %v437 = vunpack.c.l.b16 %v401
      %v438 = vunpack.c.l.b16 %v402
      %v439 = vunpack.c.l.b16 %v403
      %v440 = vunpack.c.l.b16 %v404
      %v441 = vunpack.c.l.b16 %v405
      %v442 = vunpack.c.l.b16 %v406
      %v443 = vunpack.c.l.b16 %v407
      %v444 = vunpack.c.l.b16 %v408
      %v445 = vunpack.c.l.b16 %v409
      %v446 = vpack.c.b16 %v431, %v430
      %v447 = vpack.c.b16 %v433, %v432
      %v448 = vpack.c.b16 %v435, %v434
      %v449 = vpack.c.b16 %v437, %v436
      %v450 = vpack.c.b16 %v439, %v438
      %v451 = vpack.c.b16 %v441, %v440
      %v452 = vpack.c.b16 %v443, %v442
      %v453 = vpack.c.b16 %v445, %v444
      %v458 = vunpack.c.l.b16 %v410
      %v459 = vunpack.c.l.b16 %v411
      %v460 = vunpack.c.l.b16 %v412
      %v461 = vunpack.c.l.b16 %v413
      %v462 = vpack.c.b16 %v459, %v458
      %v463 = vpack.c.b16 %v461, %v460
      %v467 = vsel %vm344, %v446, 0
      %v470 = vsel %vm344, %v447, 0
      %v473 = vsel %vm344, %v448, 0
      %v476 = vsel %vm344, %v449, 0
      %v479 = vsel %vm344, %v450, 0
      %v482 = vsel %vm344, %v451, 0
      %v485 = vsel %vm344, %v452, 0
      %v488 = vsel %vm344, %v453, 0
      %490 = vmatpush.bf16.msra.mxu0 0
      %491 = vmatpush.bf16.msra.mxu0 0
      %492 = vmatpush.bf16.msra.mxu0 0
      %493 = vmatpush.bf16.msra.mxu0 0
      %494 = vmatpush.bf16.msra.mxu0 0
      %495 = vmatpush.bf16.msra.mxu0 0
      %496 = vmatpush.bf16.msra.mxu0 %v463
      %497 = vmatpush.bf16.msra.mxu0 %v462
      %498 = vmatmul.bf16.gmra.mxu0 %v467
      %v499 = vpop.f32.mrf.mxu0
      %v500 = vadd.f32 0.0, %v499
      %v501 = vpop.f32.mrf.mxu0
      %v502 = vadd.f32 0.0, %v501
      %503 = vmatmul.bf16.gmra.mxu0 %v470
      %v504 = vpop.f32.mrf.mxu0
      %v505 = vadd.f32 0.0, %v504
      %v506 = vpop.f32.mrf.mxu0
      %v507 = vadd.f32 0.0, %v506
      %508 = vmatmul.bf16.gmra.mxu0 %v473
      %v509 = vpop.f32.mrf.mxu0
      %v510 = vadd.f32 0.0, %v509
      %v511 = vpop.f32.mrf.mxu0
      %v512 = vadd.f32 0.0, %v511
      %513 = vmatmul.bf16.gmra.mxu0 %v476
      %v514 = vpop.f32.mrf.mxu0
      %v515 = vadd.f32 0.0, %v514
      %v516 = vpop.f32.mrf.mxu0
      %v517 = vadd.f32 0.0, %v516
      %518 = vmatmul.bf16.gmra.mxu0 %v479
      %v519 = vpop.f32.mrf.mxu0
      %v520 = vadd.f32 0.0, %v519
      %v521 = vpop.f32.mrf.mxu0
      %v522 = vadd.f32 0.0, %v521
      %523 = vmatmul.bf16.gmra.mxu0 %v482
      %v524 = vpop.f32.mrf.mxu0
      %v525 = vadd.f32 0.0, %v524
      %v526 = vpop.f32.mrf.mxu0
      %v527 = vadd.f32 0.0, %v526
      %528 = vmatmul.bf16.gmra.mxu0 %v485
      %v529 = vpop.f32.mrf.mxu0
      %v530 = vadd.f32 0.0, %v529
      %v531 = vpop.f32.mrf.mxu0
      %v532 = vadd.f32 0.0, %v531
      %533 = vmatmul.bf16.gmra.mxu0 %v488
      %v534 = vpop.f32.mrf.mxu0
      %v535 = vadd.f32 0.0, %v534
      %v536 = vpop.f32.mrf.mxu0
      %v537 = vadd.f32 0.0, %v536
      %538 = vdwg.mxu0
      %v539 = vpack.c.bf16 %v500, %v500
      %v540 = vpack.c.bf16 %v502, %v502
      %v541 = vpack.c.bf16 %v505, %v505
      %v542 = vpack.c.bf16 %v507, %v507
      %v543 = vpack.c.bf16 %v510, %v510
      %v544 = vpack.c.bf16 %v512, %v512
      %v545 = vpack.c.bf16 %v515, %v515
      %v546 = vpack.c.bf16 %v517, %v517
      %v547 = vpack.c.bf16 %v520, %v520
      %v548 = vpack.c.bf16 %v522, %v522
      %v549 = vpack.c.bf16 %v525, %v525
      %v550 = vpack.c.bf16 %v527, %v527
      %v551 = vpack.c.bf16 %v530, %v530
      %v552 = vpack.c.bf16 %v532, %v532
      %v553 = vpack.c.bf16 %v535, %v535
      %v554 = vpack.c.bf16 %v537, %v537
      %v563 = vunpack.c.l.b16 %v539
      %v564 = vunpack.c.l.b16 %v540
      %v565 = vunpack.c.l.b16 %v541
      %v566 = vunpack.c.l.b16 %v542
      %v567 = vunpack.c.l.b16 %v543
      %v568 = vunpack.c.l.b16 %v544
      %v569 = vunpack.c.l.b16 %v545
      %v570 = vunpack.c.l.b16 %v546
      %v571 = vpack.c.b16 %v564, %v563
      %v572 = vpack.c.b16 %v566, %v565
      %v573 = vpack.c.b16 %v568, %v567
      %v574 = vpack.c.b16 %v570, %v569
      %579 = vxpose.xlu0.c.b16.start [1/8] %v571, 128
      %580 = vxpose.xlu0.c.b16.cont [2/8] %v572, 128
      %581 = vxpose.xlu0.c.b16.cont [3/8] %v573, 128
      %582 = vxpose.xlu0.c.b16.cont [4/8] %v574, 128
      %583 = vxpose.xlu0.c.b16.cont [5/8] 0, 128
      %584 = vxpose.xlu0.c.b16.cont [6/8] 0, 128
      %585 = vxpose.xlu0.c.b16.cont [7/8] 0, 128
      %586 = vxpose.xlu0.c.b16.end [8/8] 0, 128
      %v587 = vpop.trf.xlu0
      %v588 = vpop.trf.xlu0
      %v589 = vpop.trf.xlu0
      %v590 = vpop.trf.xlu0
      %v591 = vpop.trf.xlu0
      %v592 = vpop.trf.xlu0
      %v593 = vpop.trf.xlu0
      %v594 = vpop.trf.xlu0
      %v603 = vunpack.c.l.b16 %v547
      %v604 = vunpack.c.l.b16 %v548
      %v605 = vunpack.c.l.b16 %v549
      %v606 = vunpack.c.l.b16 %v550
      %v607 = vunpack.c.l.b16 %v551
      %v608 = vunpack.c.l.b16 %v552
      %v609 = vunpack.c.l.b16 %v553
      %v610 = vunpack.c.l.b16 %v554
      %v611 = vpack.c.b16 %v604, %v603
      %v612 = vpack.c.b16 %v606, %v605
      %v613 = vpack.c.b16 %v608, %v607
      %v614 = vpack.c.b16 %v610, %v609
      %vm619 = vcmask 523264
      %v621 = vsel %vm619, %v587, 0
      %v624 = vsel %vm619, %v588, 0
      %v627 = vsel %vm619, %v589, 0
      %v630 = vsel %vm619, %v590, 0
      %v633 = vsel %vm619, %v591, 0
      %v636 = vsel %vm619, %v592, 0
      %v639 = vsel %vm619, %v593, 0
      %v642 = vsel %vm619, %v594, 0
      %644 = vmatpush.bf16.msra.mxu0 0
      %645 = vmatpush.bf16.msra.mxu0 0
      %646 = vmatpush.bf16.msra.mxu0 0
      %647 = vmatpush.bf16.msra.mxu0 0
      %648 = vmatpush.bf16.msra.mxu0 %v614
      %649 = vmatpush.bf16.msra.mxu0 %v613
      %650 = vmatpush.bf16.msra.mxu0 %v612
      %651 = vmatpush.bf16.msra.mxu0 %v611
      %652 = vmatmul.bf16.gmra.mxu0 %v621
      %v653 = vpop.f32.mrf.mxu0
      %v654 = vadd.f32 0.0, %v653
      %v655 = vpop.f32.mrf.mxu0
      %v656 = vadd.f32 0.0, %v655
      %657 = vmatmul.bf16.gmra.mxu0 %v624
      %v658 = vpop.f32.mrf.mxu0
      %v659 = vadd.f32 0.0, %v658
      %v660 = vpop.f32.mrf.mxu0
      %v661 = vadd.f32 0.0, %v660
      %662 = vmatmul.bf16.gmra.mxu0 %v627
      %v663 = vpop.f32.mrf.mxu0
      %v664 = vadd.f32 0.0, %v663
      %v665 = vpop.f32.mrf.mxu0
      %v666 = vadd.f32 0.0, %v665
      %667 = vmatmul.bf16.gmra.mxu0 %v630
      %v668 = vpop.f32.mrf.mxu0
      %v669 = vadd.f32 0.0, %v668
      %v670 = vpop.f32.mrf.mxu0
      %v671 = vadd.f32 0.0, %v670
      %672 = vmatmul.bf16.gmra.mxu0 %v633
      %v673 = vpop.f32.mrf.mxu0
      %v674 = vadd.f32 0.0, %v673
      %v675 = vpop.f32.mrf.mxu0
      %v676 = vadd.f32 0.0, %v675
      %677 = vmatmul.bf16.gmra.mxu0 %v636
      %v678 = vpop.f32.mrf.mxu0
      %v679 = vadd.f32 0.0, %v678
      %v680 = vpop.f32.mrf.mxu0
      %v681 = vadd.f32 0.0, %v680
      %682 = vmatmul.bf16.gmra.mxu0 %v639
      %v683 = vpop.f32.mrf.mxu0
      %v684 = vadd.f32 0.0, %v683
      %v685 = vpop.f32.mrf.mxu0
      %v686 = vadd.f32 0.0, %v685
      %687 = vmatmul.bf16.gmra.mxu0 %v642
      %v688 = vpop.f32.mrf.mxu0
      %v689 = vadd.f32 0.0, %v688
      %v690 = vpop.f32.mrf.mxu0
      %v691 = vadd.f32 0.0, %v690
      %692 = vdwg.mxu0
      %v693 = vld [vmem:[%s6] sm:$0xff]
      %v694 = vld [vmem:[%s6 + $0x8] sm:$0xff]
      %v695 = vld [vmem:[%s6 + $0x10] sm:$0xff]
      %v696 = vld [vmem:[%s6 + $0x18] sm:$0xff]
      %v697 = vld [vmem:[%s6 + $0x20] sm:$0xff]
      %v698 = vld [vmem:[%s6 + $0x28] sm:$0xff]
      %v699 = vld [vmem:[%s6 + $0x30] sm:$0xff]
      %v700 = vld [vmem:[%s6 + $0x38] sm:$0xff]
      %v701 = vld [vmem:[%s6 + $0x40] sm:$0xff]
      %v702 = vld [vmem:[%s6 + $0x48] sm:$0xff]
      %v703 = vld [vmem:[%s6 + $0x50] sm:$0xff]
      %v704 = vld [vmem:[%s6 + $0x58] sm:$0xff]
      %v705 = vld [vmem:[%s6 + $0x60] sm:$0xff]
      %v706 = vld [vmem:[%s6 + $0x68] sm:$0xff]
      %v707 = vld [vmem:[%s6 + $0x70] sm:$0xff]
      %v708 = vld [vmem:[%s6 + $0x78] sm:$0xff]
      %v709 = vmul.f32 %v654, %v693
      %v710 = vmul.f32 %v656, %v694
      %v711 = vmul.f32 %v659, %v695
      %v712 = vmul.f32 %v661, %v696
      %v713 = vmul.f32 %v664, %v697
      %v714 = vmul.f32 %v666, %v698
      %v715 = vmul.f32 %v669, %v699
      %v716 = vmul.f32 %v671, %v700
      %v717 = vmul.f32 %v674, %v701
      %v718 = vmul.f32 %v676, %v702
      %v719 = vmul.f32 %v679, %v703
      %v720 = vmul.f32 %v681, %v704
      %v721 = vmul.f32 %v684, %v705
      %v722 = vmul.f32 %v686, %v706
      %v723 = vmul.f32 %v689, %v707
      %v724 = vmul.f32 %v691, %v708
      %v725 = vpack.c.bf16 %v709, %v709
      %v726 = vpack.c.bf16 %v710, %v710
      %v727 = vpack.c.bf16 %v711, %v711
      %v728 = vpack.c.bf16 %v712, %v712
      %v729 = vpack.c.bf16 %v713, %v713
      %v730 = vpack.c.bf16 %v714, %v714
      %v731 = vpack.c.bf16 %v715, %v715
      %v732 = vpack.c.bf16 %v716, %v716
      %v733 = vpack.c.bf16 %v717, %v717
      %v734 = vpack.c.bf16 %v718, %v718
      %v735 = vpack.c.bf16 %v719, %v719
      %v736 = vpack.c.bf16 %v720, %v720
      %v737 = vpack.c.bf16 %v721, %v721
      %v738 = vpack.c.bf16 %v722, %v722
      %v739 = vpack.c.bf16 %v723, %v723
      %v740 = vpack.c.bf16 %v724, %v724
      %v749 = vunpack.c.l.b16 %v386
      %v750 = vunpack.c.l.b16 %v387
      %v751 = vunpack.c.l.b16 %v388
      %v752 = vunpack.c.l.b16 %v389
      %v753 = vunpack.c.l.b16 %v390
      %v754 = vunpack.c.l.b16 %v391
      %v755 = vunpack.c.l.b16 %v392
      %v756 = vunpack.c.l.b16 %v393
      %v757 = vpack.c.b16 %v750, %v749
      %v758 = vpack.c.b16 %v752, %v751
      %v759 = vpack.c.b16 %v754, %v753
      %v760 = vpack.c.b16 %v756, %v755
      %v781 = vunpack.c.l.b16 %v725
      %v782 = vunpack.c.l.b16 %v726
      %v783 = vunpack.c.l.b16 %v727
      %v784 = vunpack.c.l.b16 %v728
      %v785 = vunpack.c.l.b16 %v729
      %v786 = vunpack.c.l.b16 %v730
      %v787 = vunpack.c.l.b16 %v731
      %v788 = vunpack.c.l.b16 %v732
      %v789 = vunpack.c.l.b16 %v733
      %v790 = vunpack.c.l.b16 %v734
      %v791 = vunpack.c.l.b16 %v735
      %v792 = vunpack.c.l.b16 %v736
      %v793 = vunpack.c.l.b16 %v737
      %v794 = vunpack.c.l.b16 %v738
      %v795 = vunpack.c.l.b16 %v739
      %v796 = vunpack.c.l.b16 %v740
      %v797 = vpack.c.b16 %v782, %v781
      %v798 = vpack.c.b16 %v784, %v783
      %v799 = vpack.c.b16 %v786, %v785
      %v800 = vpack.c.b16 %v788, %v787
      %v801 = vpack.c.b16 %v790, %v789
      %v802 = vpack.c.b16 %v792, %v791
      %v803 = vpack.c.b16 %v794, %v793
      %v804 = vpack.c.b16 %v796, %v795
      %813 = vmatpush.bf16.msra.mxu0 %v804
      %814 = vmatpush.bf16.msra.mxu0 %v803
      %815 = vmatpush.bf16.msra.mxu0 %v802
      %816 = vmatpush.bf16.msra.mxu0 %v801
      %817 = vmatpush.bf16.msra.mxu0 %v800
      %818 = vmatpush.bf16.msra.mxu0 %v799
      %819 = vmatpush.bf16.msra.mxu0 %v798
      %820 = vmatpush.bf16.msra.mxu0 %v797
      %821 = vmatmul.bf16.gmra.mxu0 %v757
      %v822 = vpop.f32.mrf.mxu0
      %v823 = vadd.f32 0.0, %v822
      %v824 = vpop.f32.mrf.mxu0
      %v825 = vadd.f32 0.0, %v824
      %826 = vmatmul.bf16.gmra.mxu0 %v758
      %v827 = vpop.f32.mrf.mxu0
      %v828 = vadd.f32 0.0, %v827
      %v829 = vpop.f32.mrf.mxu0
      %v830 = vadd.f32 0.0, %v829
      %831 = vmatmul.bf16.gmra.mxu0 %v759
      %v832 = vpop.f32.mrf.mxu0
      %v833 = vadd.f32 0.0, %v832
      %v834 = vpop.f32.mrf.mxu0
      %v835 = vadd.f32 0.0, %v834
      %836 = vmatmul.bf16.gmra.mxu0 %v760
      %v837 = vpop.f32.mrf.mxu0
      %v838 = vadd.f32 0.0, %v837
      %v839 = vpop.f32.mrf.mxu0
      %v840 = vadd.f32 0.0, %v839
      %841 = vdwg.mxu0
      %v842 = vpack.c.bf16 %v825, %v823
      %v843 = vpack.c.bf16 %v830, %v828
      %v844 = vpack.c.bf16 %v835, %v833
      %v845 = vpack.c.bf16 %v840, %v838
      %v846 = vld [vmem:[%s4] sm:$0xf]
      %v847 = vld [vmem:[%s4 + $0x4] sm:$0xf]
      %v848 = vld [vmem:[%s4 + $0x8] sm:$0xf]
      %v849 = vld [vmem:[%s4 + $0xc] sm:$0xf]
      %v850 = vld [vmem:[%s4 + $0x10] sm:$0xf]
      %v851 = vld [vmem:[%s4 + $0x14] sm:$0xf]
      %v852 = vld [vmem:[%s4 + $0x18] sm:$0xf]
      %v853 = vld [vmem:[%s4 + $0x1c] sm:$0xf]
      %v854 = vld [vmem:[%s4 + $0x20] sm:$0xf]
      %v855 = vld [vmem:[%s4 + $0x24] sm:$0xf]
      %v856 = vld [vmem:[%s4 + $0x28] sm:$0xf]
      %v857 = vld [vmem:[%s4 + $0x2c] sm:$0xf]
      %v858 = vld [vmem:[%s4 + $0x30] sm:$0xf]
      %v859 = vld [vmem:[%s4 + $0x34] sm:$0xf]
      %v860 = vld [vmem:[%s4 + $0x38] sm:$0xf]
      %v861 = vld [vmem:[%s4 + $0x3c] sm:$0xf]
      %v862 = vld [vmem:[%s5] sm:$0x1]
      %v864 = vperm.slane %v862, 0
      %v882 = vunpack.c.l.b16 %v846
      %v883 = vunpack.c.l.b16 %v847
      %v884 = vunpack.c.l.b16 %v848
      %v885 = vunpack.c.l.b16 %v849
      %v886 = vunpack.c.l.b16 %v850
      %v887 = vunpack.c.l.b16 %v851
      %v888 = vunpack.c.l.b16 %v852
      %v889 = vunpack.c.l.b16 %v853
      %v890 = vunpack.c.l.b16 %v854
      %v891 = vunpack.c.l.b16 %v855
      %v892 = vunpack.c.l.b16 %v856
      %v893 = vunpack.c.l.b16 %v857
      %v894 = vunpack.c.l.b16 %v858
      %v895 = vunpack.c.l.b16 %v859
      %v896 = vunpack.c.l.b16 %v860
      %v897 = vunpack.c.l.b16 %v861
      %v898 = vpack.c.b16 %v883, %v882
      %v899 = vpack.c.b16 %v885, %v884
      %v900 = vpack.c.b16 %v887, %v886
      %v901 = vpack.c.b16 %v889, %v888
      %v902 = vpack.c.b16 %v891, %v890
      %v903 = vpack.c.b16 %v893, %v892
      %v904 = vpack.c.b16 %v895, %v894
      %v905 = vpack.c.b16 %v897, %v896
      %914 = vmatpush.bf16.msra.mxu0 %v905
      %915 = vmatpush.bf16.msra.mxu0 %v904
      %916 = vmatpush.bf16.msra.mxu0 %v903
      %917 = vmatpush.bf16.msra.mxu0 %v902
      %918 = vmatpush.bf16.msra.mxu0 %v901
      %919 = vmatpush.bf16.msra.mxu0 %v900
      %920 = vmatpush.bf16.msra.mxu0 %v899
      %921 = vmatpush.bf16.msra.mxu0 %v898
      %922 = vmatmul.bf16.gmra.mxu0 %v842
      %v923 = vpop.f32.mrf.mxu0
      %v924 = vadd.f32 %v864, %v923
      %v925 = vpop.f32.mrf.mxu0
      %v926 = vadd.f32 %v864, %v925
      %927 = vmatmul.bf16.gmra.mxu0 %v843
      %v928 = vpop.f32.mrf.mxu0
      %v929 = vadd.f32 %v864, %v928
      %v930 = vpop.f32.mrf.mxu0
      %v931 = vadd.f32 %v864, %v930
      %932 = vmatmul.bf16.gmra.mxu0 %v844
      %v933 = vpop.f32.mrf.mxu0
      %v934 = vadd.f32 %v864, %v933
      %v935 = vpop.f32.mrf.mxu0
      %v936 = vadd.f32 %v864, %v935
      %937 = vmatmul.bf16.gmra.mxu0 %v845
      %v938 = vpop.f32.mrf.mxu0
      %v939 = vadd.f32 %v864, %v938
      %v940 = vpop.f32.mrf.mxu0
      %v941 = vadd.f32 %v864, %v940
      %942 = vdwg.mxu0
      %943 = vst.msk [vmem:[%s298] sm:$0xff] %vm344, %v924
      %944 = vst.msk [vmem:[%s298 + $0x8] sm:$0xff] %vm344, %v926
      %945 = vst.msk [vmem:[%s298 + $0x10] sm:$0xff] %vm344, %v929
      %946 = vst.msk [vmem:[%s298 + $0x18] sm:$0xff] %vm344, %v931
      %947 = vst.msk [vmem:[%s298 + $0x20] sm:$0xff] %vm344, %v934
      %948 = vst.msk [vmem:[%s298 + $0x28] sm:$0xff] %vm344, %v936
      %949 = vst.msk [vmem:[%s298 + $0x30] sm:$0xff] %vm344, %v939
      %950 = vst.msk [vmem:[%s298 + $0x38] sm:$0xff] %vm344, %v941
      %p951 = scmp.lt.s32.totalorder %s18, 1
      %s952 = scalar_select %p951, %s18, 1
      %s953 = smul.addr %s952, 8
      %s954 = smul.addr %s953, 8
      %s955 = scalar_lea.vmem %s7, %s954
      // Predicated region
      $region49: #{tpu_custom_call.1} parent=47 // pred_check
        %p956 = pneg %p193
      $region50: #{tpu_custom_call.1} parent=47 // pred_check_branch
        %958 = sbr.rel (%p956) target = $region52
      $region51: #{tpu_custom_call.1} parent=47 // pred_region
        _
      $region52: #{tpu_custom_call.1} parent=47 // pred_fallthru
        _
    $region48: #{tpu_custom_call.1} parent=5 // pred_fallthru
      _
    %p959 = scmp.le.s32.totalorder 2, %s13
    // Predicated region
    $region53: #{tpu_custom_call.1} parent=5 // pred_check
      %p960 = pneg %p959
    $region54: #{tpu_custom_call.1} parent=5 // pred_check_branch
      %962 = sbr.rel (%p960) target = $region56
    $region55: #{tpu_custom_call.1} parent=5 // pred_region
      %s963 = ssub.s32 %s13, 2
      // Predicated region
      $region57: #{tpu_custom_call.1} parent=55 // pred_check
        %p964 = pneg %p199
      $region58: #{tpu_custom_call.1} parent=55 // pred_check_branch
        %966 = sbr.rel (%p964) target = $region60
      $region59: #{tpu_custom_call.1} parent=55 // pred_region
        %p967 = scmp.lt.s32.totalorder %s19, 1
        %s968 = scalar_select %p967, %s19, 1
        %s969 = smul.addr %s968, 8
        %s970 = smul.addr %s969, 8
        %s971 = scalar_lea.vmem %s7, %s970
      $region60: #{tpu_custom_call.1} parent=55 // pred_fallthru
        _
    $region56: #{tpu_custom_call.1} parent=5 // pred_fallthru
      _
  $region6: #{tpu_custom_call.1} parent=0 // loop_footer
    %s17 = sadd.s32 1, %s13
  $region7: #{tpu_custom_call.1} parent=0 // loop_footer_branch
    %12 = sbr.rel target = $region3
  $region8: #{tpu_custom_call.1} parent=0 // loop_exit
    _

</llo_original>
